<compile_context>
chip_gen: v5e
topology: v5e:2x2
jax: 0.10.0
libtpu: 0.0.40
codegen_flags: <defaults>
</compile_context>

<pallas_src>
import jax
import jax.numpy as jnp
from jax.experimental import pallas as pl
from jax.experimental.pallas import tpu as pltpu


# ----------------------------- Pallas kernels --------------------------------------

def _in_proj_kernel(x_ref, w1_ref, b1_ref, h1_ref):
    # x: (tm, C_in) bf16 ; W1: (C_in, C_mid) bf16 with BN1 scale pre-folded ; b1: f32
    h1 = jnp.dot(x_ref[...], w1_ref[...], preferred_element_type=jnp.float32)
    h1_ref[...] = jnp.maximum(h1 + b1_ref[...], 0.0).astype(h1_ref.dtype)   # BN1 + ReLU


def _out_proj_shortcut_kernel(g_ref, x_ref, w3_ref, b2_ref,
                              w2_ref, b3_ref, wsc_ref, bsc_ref, o_ref):
    # g: (tm, 27*C_mid) bf16 ; x: (tm, C_in) bf16 ; weights bf16 (BN scales folded)
    h2 = jnp.dot(g_ref[...], w3_ref[...], preferred_element_type=jnp.float32)
    h2 = jnp.maximum(h2 + b2_ref[...], 0.0)                                  # BN2 + ReLU
    h3 = jnp.dot(h2.astype(w2_ref.dtype), w2_ref[...],
                 preferred_element_type=jnp.float32) + b3_ref[...]           # BN3
    res = jnp.dot(x_ref[...], wsc_ref[...],
                  preferred_element_type=jnp.float32) + bsc_ref[...]         # shortcut BN
    o_ref[...] = jnp.maximum(h3 + res, 0.0)                                  # add + ReLU


def _out_proj_identity_kernel(g_ref, res_ref, w3_ref, b2_ref,
                              w2_ref, b3_ref, o_ref):
    # res: (tm, C_out) f32 identity residual (original feature precision)
    h2 = jnp.dot(g_ref[...], w3_ref[...], preferred_element_type=jnp.float32)
    h2 = jnp.maximum(h2 + b2_ref[...], 0.0)
    h3 = jnp.dot(h2.astype(w2_ref.dtype), w2_ref[...],
                 preferred_element_type=jnp.float32) + b3_ref[...]
    o_ref[...] = jnp.maximum(h3 + res_ref[...], 0.0)


# ----------------------------- wrapper ----------------------------------------------

def _fold_bn(p):
    scale = p["gamma"] / jnp.sqrt(p["var"] + p["eps"])
    bias = p["beta"] - p["mean"] * scale
    return scale.astype(jnp.float32), bias.astype(jnp.float32)


def _fold_bn_into_weight(w, p, compute_dtype):
    """Fold the eval-mode BN scale into the matmul weight; return (bf16 W, f32 bias row)."""
    scale, bias = _fold_bn(p)
    w_folded = (w.astype(jnp.float32) * scale[None, :]).astype(compute_dtype)
    return w_folded, bias.reshape(1, -1)


def _round_up(n, m):
    return ((n + m - 1) // m) * m


def mink_res_block_bottleneck(feats, nbr_idx, params, *, tm=512,
                              compute_dtype=jnp.bfloat16):
    """Forward pass of MinkResBlock_BottleNeck on sparse-tensor features.

    feats:   [N, C_in]  features of the active voxels
    nbr_idx: [N, 27]    int32 neighbour index per 3x3x3 kernel offset (N == missing)
    params:  weights in matmul-ready layout (no transposes needed) + eval-mode BN stats
    returns: [N, C_out] float32  (assign_feats(...) casts features to float32)
    """
    n, c_in = feats.shape
    k_vol = nbr_idx.shape[1]
    c_mid = params["w1"].shape[1]
    c_out = params["w2"].shape[1]
    has_shortcut = "wsc" in params

    # Fold BN scales into the weights once (tiny wrapper-side op over the weight
    # matrices) so the kernels only do  ReLU(x @ W + b).
    w1, b1 = _fold_bn_into_weight(params["w1"], params["bn1"], compute_dtype)
    w3, b2 = _fold_bn_into_weight(params["w3"].reshape(k_vol * c_mid, c_mid),
                                  params["bn2"], compute_dtype)
    w2, b3 = _fold_bn_into_weight(params["w2"], params["bn3"], compute_dtype)

    n_pad = _round_up(n, tm)
    grid = (n_pad // tm,)
    x_pad = jnp.pad(feats, ((0, n_pad - n), (0, 0)))
    x = x_pad.astype(compute_dtype)

    cparams = pltpu.CompilerParams(
        dimension_semantics=("parallel",),          # row tiles shard across TCs (v7x)
        vmem_limit_bytes=32 * 1024 * 1024,          # explicit budget, safe on v5e/v6e/v7x
    )

    # ---- stage 1: 1x1 in-projection + BN1 + ReLU ------------------------------------
    # NOTE: c_mid is usually < 128 lanes so the h1 store is a masked vst; acceptable —
    # the dominant traffic is the im2col buffer consumed by stage 2.
    h1 = pl.pallas_call(
        _in_proj_kernel,
        out_shape=jax.ShapeDtypeStruct((n_pad, c_mid), compute_dtype),
        grid_spec=pl.GridSpec(
            grid=grid,
            in_specs=[
                pl.BlockSpec((tm, c_in), lambda i: (i, 0)),
                pl.BlockSpec((c_in, c_mid), lambda i: (0, 0)),
                pl.BlockSpec((1, c_mid), lambda i: (0, 0)),
            ],
            out_specs=pl.BlockSpec((tm, c_mid), lambda i: (i, 0)),
        ),
        compiler_params=cparams,
    )(x, w1, b1)

    # ---- 3x3x3 sparse-conv neighbour gather (im2col) --------------------------------
    # TODO(synk): an in-kernel DMA gather would avoid materialising the [N, 27*C_mid]
    #             im2col buffer in HBM; kept as a plain XLA gather here for robustness.
    h1_zpad = jnp.concatenate(
        [h1[:n], jnp.zeros((1, c_mid), h1.dtype)], axis=0)   # row N == inactive neighbour
    idx = jnp.pad(nbr_idx.astype(jnp.int32), ((0, n_pad - n), (0, 0)),
                  constant_values=n)
    gathered = jnp.take(h1_zpad, idx.reshape(-1), axis=0).reshape(n_pad, k_vol * c_mid)

    # ---- stage 2: conv3x3 GEMM + BN2 + ReLU + 1x1 out-proj + BN3 + residual + ReLU --
    if has_shortcut:
        wsc, bsc = _fold_bn_into_weight(params["wsc"], params["bnsc"], compute_dtype)
        out = pl.pallas_call(
            _out_proj_shortcut_kernel,
            out_shape=jax.ShapeDtypeStruct((n_pad, c_out), jnp.float32),
            grid_spec=pl.GridSpec(
                grid=grid,
                in_specs=[
                    pl.BlockSpec((tm, k_vol * c_mid), lambda i: (i, 0)),
                    pl.BlockSpec((tm, c_in), lambda i: (i, 0)),
                    pl.BlockSpec((k_vol * c_mid, c_mid), lambda i: (0, 0)),
                    pl.BlockSpec((1, c_mid), lambda i: (0, 0)),
                    pl.BlockSpec((c_mid, c_out), lambda i: (0, 0)),
                    pl.BlockSpec((1, c_out), lambda i: (0, 0)),
                    pl.BlockSpec((c_in, c_out), lambda i: (0, 0)),
                    pl.BlockSpec((1, c_out), lambda i: (0, 0)),
                ],
                out_specs=pl.BlockSpec((tm, c_out), lambda i: (i, 0)),
            ),
            compiler_params=cparams,
        )(gathered, x, w3, b2, w2, b3, wsc, bsc)
    else:
        residual = x_pad.astype(jnp.float32)   # identity residual at full precision
        out = pl.pallas_call(
            _out_proj_identity_kernel,
            out_shape=jax.ShapeDtypeStruct((n_pad, c_out), jnp.float32),
            grid_spec=pl.GridSpec(
                grid=grid,
                in_specs=[
                    pl.BlockSpec((tm, k_vol * c_mid), lambda i: (i, 0)),
                    pl.BlockSpec((tm, c_out), lambda i: (i, 0)),
                    pl.BlockSpec((k_vol * c_mid, c_mid), lambda i: (0, 0)),
                    pl.BlockSpec((1, c_mid), lambda i: (0, 0)),
                    pl.BlockSpec((c_mid, c_out), lambda i: (0, 0)),
                    pl.BlockSpec((1, c_out), lambda i: (0, 0)),
                ],
                out_specs=pl.BlockSpec((tm, c_out), lambda i: (i, 0)),
            ),
            compiler_params=cparams,
        )(gathered, residual, w3, b2, w2, b3)

    return out[:n]


# ----------------------------- test harness -----------------------------------------

def build_kernel_map(coords):
    """nbr_idx[i, k] = index of the voxel at coords[i] + offset_k, or N if inactive.

    TODO(synk): MinkowskiEngine's CoordinateManager (coordinate hashing / kernel-map
    construction) has no Pallas equivalent; built here with a dense JAX comparison.
    """
    n = coords.shape[0]
    offs = jnp.array([(dx, dy, dz)
                      for dx in (-1, 0, 1)
                      for dy in (-1, 0, 1)
                      for dz in (-1, 0, 1)], dtype=jnp.int32)           # [27, 3]
    tgt = coords[:, None, :] + offs[None, :, :]                          # [N, 27, 3]
    eq = jnp.all(tgt[:, :, None, :] == coords[None, None, :, :], -1)     # [N, 27, N]
    hit = jnp.any(eq, axis=-1)
    idx = jnp.argmax(eq, axis=-1)
    return jnp.where(hit, idx, n).astype(jnp.int32)


def reference_forward(feats, nbr_idx, params):
    """Pure-JAX float32 reference with identical (inference-mode, folded) BatchNorm."""
    def bn(x, p):
        s, b = _fold_bn(p)
        return x * s[None, :] + b[None, :]

    n = feats.shape[0]
    k_vol = nbr_idx.shape[1]
    c_mid = params["w1"].shape[1]
    h1 = jax.nn.relu(bn(feats @ params["w1"], params["bn1"]))
    h1p = jnp.concatenate([h1, jnp.zeros((1, c_mid), h1.dtype)], axis=0)
    g = h1p[nbr_idx].reshape(n, k_vol * c_mid)
    h2 = jax.nn.relu(bn(g @ params["w3"].reshape(k_vol * c_mid, c_mid), params["bn2"]))
    h3 = bn(h2 @ params["w2"], params["bn3"])
    if "wsc" in params:
        res = bn(feats @ params["wsc"], params["bnsc"])
    else:
        res = feats
    return jax.nn.relu(h3 + res)


def init_params(key, c_in, c_out, k_vol=27):
    """Deterministic params (nn.Linear/ME-style uniform init, eval-mode BN stats).

    Weights are stored in matmul-ready layout ([C_in, C_out] / [K, C_in, C_out]) so the
    wrapper never has to transpose them.
    """
    c_mid = c_out // 4
    ks = jax.random.split(key, 8)

    def uni(k, shape, fan_in):
        b = 1.0 / jnp.sqrt(jnp.float32(fan_in))
        return jax.random.uniform(k, shape, jnp.float32, -b, b)

    def bn_stats(k, c):
        k1, k2, k3, k4 = jax.random.split(k, 4)
        return dict(
            gamma=jax.random.uniform(k1, (c,), jnp.float32, 0.5, 1.5),
            beta=0.1 * jax.random.normal(k2, (c,), jnp.float32),
            mean=0.1 * jax.random.normal(k3, (c,), jnp.float32),
            var=jax.random.uniform(k4, (c,), jnp.float32, 0.5, 1.5),
            eps=1e-5,
        )

    params = {
        "w1": uni(ks[0], (c_in, c_mid), c_in), "bn1": bn_stats(ks[1], c_mid),
        "w3": uni(ks[2], (k_vol, c_mid, c_mid), k_vol * c_mid), "bn2": bn_stats(ks[3], c_mid),
        "w2": uni(ks[4], (c_mid, c_out), c_mid), "bn3": bn_stats(ks[5], c_out),
    }
    if c_in != c_out:
        params["wsc"] = uni(ks[6], (c_in, c_out), c_in)
        params["bnsc"] = bn_stats(ks[7], c_out)
    return params


if __name__ == "__main__":
    key = jax.random.PRNGKey(0)
    k_coord, k_feat, k_par = jax.random.split(key, 3)

    # Small synthetic sparse tensor: 333 active voxels inside an 8^3 grid.
    grid_side, n_pts = 8, 333
    cell = jnp.arange(grid_side ** 3)
    all_coords = jnp.stack([cell // (grid_side * grid_side),
                            (cell // grid_side) % grid_side,
                            cell % grid_side], axis=-1).astype(jnp.int32)
    coords = all_coords[jax.random.permutation(k_coord, grid_side ** 3)[:n_pts]]
    nbr_idx = build_kernel_map(coords)

    # (in != out) exercises the projected shortcut; (in == out) the identity shortcut.
    for c_in, c_out in [(128, 256), (256, 256)]:
        feats = jax.random.normal(jax.random.fold_in(k_feat, c_in),
                                  (n_pts, c_in), jnp.float32)
        params = init_params(jax.random.fold_in(k_par, c_in * 1000 + c_out),
                             c_in, c_out)
        # tm=128 for the tiny demo; production default is 512 (sweep 512/1024/2048).
        y = jax.block_until_ready(
            mink_res_block_bottleneck(feats, nbr_idx, params, tm=128))
        y_ref = reference_forward(feats, nbr_idx, params)
        assert y.shape == (n_pts, c_out) and y.dtype == jnp.float32
        # bf16 matmul operands with f32 accumulation => small tolerance vs f32 reference.
        assert jnp.allclose(y, y_ref, atol=5e-2, rtol=5e-2), \
            float(jnp.max(jnp.abs(y - y_ref)))

    print("KERNEL_OK")
</pallas_src>

<mosaic_0001>
module attributes {stable_mosaic.version = 11 : i64} {
  func.func @_in_proj_kernel(%arg0: i32, %arg1: memref<128x128xbf16, #tpu.memory_space<vmem>>, %arg2: memref<128x64xbf16, #tpu.memory_space<vmem>>, %arg3: memref<1x64xf32, #tpu.memory_space<vmem>>, %arg4: memref<128x64xbf16, #tpu.memory_space<vmem>>) attributes {dimension_semantics = [#tpu.dimension_semantics<parallel>], iteration_bounds = array<i64: 3>, scalar_prefetch = 0 : i64, scratch_operands = 0 : i64, tpu.core_type = #tpu.core_type<tc>, window_params = [{transform_indices = @transform_0, window_bounds = array<i64: 128, 128>}, {pipeline_mode = #tpu.pipeline_mode<synchronous>, transform_indices = @transform_1, window_bounds = array<i64: 128, 64>}, {pipeline_mode = #tpu.pipeline_mode<synchronous>, transform_indices = @transform_2, window_bounds = array<i64: 1, 64>}, {transform_indices = @transform_3, window_bounds = array<i64: 128, 64>}]} {
    %c0 = arith.constant 0 : index
    %c0_0 = arith.constant 0 : index
    %0 = vector.load %arg1[%c0, %c0_0] : memref<128x128xbf16, #tpu.memory_space<vmem>>, vector<128x128xbf16>
    %c0_1 = arith.constant 0 : index
    %c0_2 = arith.constant 0 : index
    %1 = vector.load %arg2[%c0_1, %c0_2] : memref<128x64xbf16, #tpu.memory_space<vmem>>, vector<128x64xbf16>
    %cst = arith.constant dense<0.000000e+00> : vector<128x64xf32>
    %2 = tpu.matmul %0, %1, %cst {dimension_numbers = #tpu.dot_dimension_numbers<[1], [0], [0], [1], [0, 0, 1, 1], [], []>} : vector<128x128xbf16>, vector<128x64xbf16>, vector<128x64xf32> -> vector<128x64xf32>
    %c0_3 = arith.constant 0 : index
    %c0_4 = arith.constant 0 : index
    %3 = vector.load %arg3[%c0_3, %c0_4] : memref<1x64xf32, #tpu.memory_space<vmem>>, vector<1x64xf32>
    %4 = vector.broadcast %3 : vector<1x64xf32> to vector<128x64xf32>
    %5 = arith.addf %2, %4 : vector<128x64xf32>
    %cst_5 = arith.constant 0.000000e+00 : f32
    %6 = vector.broadcast %cst_5 : f32 to vector<128x64xf32>
    %7 = arith.maximumf %5, %6 : vector<128x64xf32>
    %8 = arith.truncf %7 : vector<128x64xf32> to vector<128x64xbf16>
    %c0_6 = arith.constant 0 : index
    %c0_7 = arith.constant 0 : index
    %9 = vector.load %arg4[%c0_6, %c0_7] : memref<128x64xbf16, #tpu.memory_space<vmem>>, vector<128x64xbf16>
    tpu.vector_store %arg4[%c0_6, %c0_7], %8 {strides = array<i32>} : memref<128x64xbf16, #tpu.memory_space<vmem>>, vector<128x64xbf16>,
    return
  }
  func.func @transform_0(%arg0: i32) -> (i32, i32) {
    %c0_i32 = arith.constant 0 : i32
    %c0_i32_0 = arith.constant 0 : i32
    return %arg0, %c0_i32 : i32, i32
  }
  func.func @transform_1(%arg0: i32) -> (i32, i32) {
    %c0_i32 = arith.constant 0 : i32
    %c0_i32_0 = arith.constant 0 : i32
    %c0_i32_1 = arith.constant 0 : i32
    return %c0_i32, %c0_i32_0 : i32, i32
  }
  func.func @transform_2(%arg0: i32) -> (i32, i32) {
    %c0_i32 = arith.constant 0 : i32
    %c0_i32_0 = arith.constant 0 : i32
    %c0_i32_1 = arith.constant 0 : i32
    return %c0_i32, %c0_i32_0 : i32, i32
  }
  func.func @transform_3(%arg0: i32) -> (i32, i32) {
    %c0_i32 = arith.constant 0 : i32
    %c0_i32_0 = arith.constant 0 : i32
    return %arg0, %c0_i32 : i32, i32
  }
}

</mosaic_0001>

<llo_original>
// kernel: tpu_custom_call.1
$region0: #{tpu_custom_call.1}
  #allocation0 [shape = 'u32[]', space=smem, size = 0x4, offset = 0x4, fixed_abs, tag = 'smem constant byte address 0x4 - core index']
  #allocation1 [shape = 'u32[72,128]{1,0:T(1,128)}', space=vmem, size = 0x9000, scoped, tag = 'internal scratch']
  %s0 = inlined_call_operand.hbm [shape: bf16[384,128], index: 0, kind: input, shape index: {}]
  %s1 = inlined_call_operand.vmem [shape: bf16[128,64], index: 1, kind: input, shape index: {}]
  %s2 = inlined_call_operand.vmem [shape: f32[1,64], index: 2, kind: input, shape index: {}]
  %s3 = inlined_call_operand.vmem [shape: bf16[384,64], index: 3, kind: output, shape index: {}]
  %s4 = sld [smem:[#allocation0]]
  $region49: #{tpu_custom_call.1} parent=0
    _
  %s6 = ssub.s32 1, %s4
  %s7 = scalar_select 0, %s6, %s4
  $region1: #{tpu_custom_call.1} parent=0
    #allocation2 [shape = 'u8[65536]{0}', space=vmem, size = 0x10000, scoped, tag = 'input window, operand 0']
    #allocation3 [shape = 's32[2]{0}', space=sflag, size = 0x8, scoped, tag = 'scoped memory for tpu_custom_call.1']
    %8 = vsyncpa [#allocation3], 0
    %s9 = scalar_lea.sflag [#allocation3], 1
    %10 = vsyncpa %s9, 0
    loop: start=0, step=1, limit=5
    $region2: #{tpu_custom_call.1} parent=1 // loop_pre_header
      _
    $region3: #{tpu_custom_call.1} parent=1 // loop_header
      %s12 = sphi 0, %s16
      %p13 = scmp.ge.s32.totalorder %s12, 5
      %s22 = sphi 0, %s24
      %s25 = sphi 0, %s22
      %s26 = sphi 0, %s25
      %s42 = sphi 0, %s26
      %s46 = sphi 0, %s46
      %s48 = sphi 0, %s46
      %s49 = sphi 0, %s48
      %s63 = sphi 0, %s49
      %s67 = sphi 0, %s67
      %s69 = sphi 0, %s67
      %s70 = sphi 0, %s69
      %s84 = sphi 0, %s70
      %s90 = sphi 0, %s92
      %s93 = sphi 0, %s90
      %s94 = sphi 0, %s93
      %s110 = sphi 0, %s94
    $region4: #{tpu_custom_call.1} parent=1 // loop_header_branch
      %15 = sbr.rel (%p13) target = $region8
    $region5: #{tpu_custom_call.1} parent=1 // loop_body
      %s17 = ssub.s32 %s12, 1
      %s18 = ssub.s32 %s12, 2
      %s19 = sadd.s32 %s12, 1
      %s20 = ssub.s32 %s12, %s19
      %p21 = scmp.eq.s32.totalorder %s20, 0
      %s23 = sadd.s32 %s22, 1
      %s24 = scalar_select %p21, %s22, %s23
      %p27 = pneg %p21
      %p28 = scmp.eq.s32.totalorder %s12, 2
      %p29 = por %p27, %p28
      %p30 = scmp.ne.s32.totalorder %s22, %s25
      %p31 = scmp.eq.s32.totalorder %s12, 0
      %p32 = por %p30, %p31
      %p33 = scmp.ne.s32.totalorder %s22, %s25
      %p34 = scmp.eq.s32.totalorder %s17, 2
      %p35 = por %p33, %p34
      %p36 = scmp.ne.s32.totalorder %s25, %s26
      %p37 = scmp.eq.s32.totalorder %s17, 0
      %p38 = por %p36, %p37
      %p39 = scmp.ne.s32.totalorder %s25, %s26
      %p40 = scmp.eq.s32.totalorder %s18, 2
      %p41 = por %p39, %p40
      %p43 = scmp.ne.s32.totalorder %s26, %s42
      %p44 = scmp.eq.s32.totalorder %s18, 0
      %p45 = por %p43, %p44
      %s47 = sadd.s32 %s46, 1
      %p50 = scmp.eq.s32.totalorder %s12, 2
      %p51 = scmp.ne.s32.totalorder %s46, %s48
      %p52 = scmp.eq.s32.totalorder %s12, 0
      %p53 = por %p51, %p52
      %p54 = scmp.ne.s32.totalorder %s46, %s48
      %p55 = scmp.eq.s32.totalorder %s17, 2
      %p56 = por %p54, %p55
      %p57 = scmp.ne.s32.totalorder %s48, %s49
      %p58 = scmp.eq.s32.totalorder %s17, 0
      %p59 = por %p57, %p58
      %p60 = scmp.ne.s32.totalorder %s48, %s49
      %p61 = scmp.eq.s32.totalorder %s18, 2
      %p62 = por %p60, %p61
      %p64 = scmp.ne.s32.totalorder %s49, %s63
      %p65 = scmp.eq.s32.totalorder %s18, 0
      %p66 = por %p64, %p65
      %s68 = sadd.s32 %s67, 1
      %p71 = scmp.eq.s32.totalorder %s12, 2
      %p72 = scmp.ne.s32.totalorder %s67, %s69
      %p73 = scmp.eq.s32.totalorder %s12, 0
      %p74 = por %p72, %p73
      %p75 = scmp.ne.s32.totalorder %s67, %s69
      %p76 = scmp.eq.s32.totalorder %s17, 2
      %p77 = por %p75, %p76
      %p78 = scmp.ne.s32.totalorder %s69, %s70
      %p79 = scmp.eq.s32.totalorder %s17, 0
      %p80 = por %p78, %p79
      %p81 = scmp.ne.s32.totalorder %s69, %s70
      %p82 = scmp.eq.s32.totalorder %s18, 2
      %p83 = por %p81, %p82
      %p85 = scmp.ne.s32.totalorder %s70, %s84
      %p86 = scmp.eq.s32.totalorder %s18, 0
      %p87 = por %p85, %p86
      %s88 = ssub.s32 %s12, %s19
      %p89 = scmp.eq.s32.totalorder %s88, 0
      %s91 = sadd.s32 %s90, 1
      %s92 = scalar_select %p89, %s90, %s91
      %p95 = pneg %p89
      %p96 = scmp.eq.s32.totalorder %s12, 2
      %p97 = por %p95, %p96
      %p98 = scmp.ne.s32.totalorder %s90, %s93
      %p99 = scmp.eq.s32.totalorder %s12, 0
      %p100 = por %p98, %p99
      %p101 = scmp.ne.s32.totalorder %s90, %s93
      %p102 = scmp.eq.s32.totalorder %s17, 2
      %p103 = por %p101, %p102
      %p104 = scmp.ne.s32.totalorder %s93, %s94
      %p105 = scmp.eq.s32.totalorder %s17, 0
      %p106 = por %p104, %p105
      %p107 = scmp.ne.s32.totalorder %s93, %s94
      %p108 = scmp.eq.s32.totalorder %s18, 2
      %p109 = por %p107, %p108
      %p111 = scmp.ne.s32.totalorder %s94, %s110
      %p112 = scmp.eq.s32.totalorder %s18, 0
      %p113 = por %p111, %p112
      %p114 = scmp.le.s32.totalorder 1, %s12
      %p115 = scmp.lt.s32.totalorder %s12, 4
      %p116 = pnand %p114, %p115
      %p117 = pneg %p116
      // Predicated region
      $region9: #{tpu_custom_call.1} parent=5 // pred_check
        _
      $region10: #{tpu_custom_call.1} parent=5 // pred_check_branch
        %119 = sbr.rel (%p116) target = $region12
      $region11: #{tpu_custom_call.1} parent=5 // pred_region
        %s120 = ssub.s32 %s12, 1
        // Predicated region
        $region13: #{tpu_custom_call.1} parent=11 // pred_check
          %p121 = pneg %p59
        $region14: #{tpu_custom_call.1} parent=11 // pred_check_branch
          %123 = sbr.rel (%p121) target = $region16
        $region15: #{tpu_custom_call.1} parent=11 // pred_region
          _
        $region16: #{tpu_custom_call.1} parent=11 // pred_fallthru
          _
        // Predicated region
        $region17: #{tpu_custom_call.1} parent=11 // pred_check
          %p124 = pneg %p80
        $region18: #{tpu_custom_call.1} parent=11 // pred_check_branch
          %126 = sbr.rel (%p124) target = $region20
        $region19: #{tpu_custom_call.1} parent=11 // pred_region
          _
        $region20: #{tpu_custom_call.1} parent=11 // pred_fallthru
          _
      $region12: #{tpu_custom_call.1} parent=5 // pred_fallthru
        _
      %p127 = scmp.lt.s32.totalorder %s12, 3
      // Predicated region
      $region21: #{tpu_custom_call.1} parent=5 // pred_check
        %p128 = pneg %p127
      $region22: #{tpu_custom_call.1} parent=5 // pred_check_branch
        %130 = sbr.rel (%p128) target = $region24
      $region23: #{tpu_custom_call.1} parent=5 // pred_region
        // Predicated region
        $region25: #{tpu_custom_call.1} parent=23 // pred_check
          %p131 = pneg %p32
        $region26: #{tpu_custom_call.1} parent=23 // pred_check_branch
          %133 = sbr.rel (%p131) target = $region28
        $region27: #{tpu_custom_call.1} parent=23 // pred_region
          %s134 = sand.u32 %s22, 1
          %s135 = scalar_lea.sflag [#allocation3], %s134
          %s136 = sand.u32 %s22, 1
          %s137 = smul.addr %s136, 64
          %s138 = scalar_lea.vmem [#allocation2], %s137
          %s139 = smul.u32 16, %s12
          %141 = vsyncadd %s135, 0
          %s142 = smul.addr %s139, 4
          %s143 = scalar_lea.hbm %s0, %s142
          %s144 = sshll.u32 %s143, 4
          %s145 = int_to_ptr.hbm [resolvable:$true] %s144
          %s146 = sshll.u32 %s138, 4
          %s147 = int_to_ptr.vmem [resolvable:$true] %s146
          %152 = dma.hbm_to_vmem [thread:$0]  %s145, 1024, %s147, %s135, 64, 64, 4
        $region28: #{tpu_custom_call.1} parent=23 // pred_fallthru
          _
      $region24: #{tpu_custom_call.1} parent=5 // pred_fallthru
        _
      %p153 = scmp.le.s32.totalorder 1, %s12
      %p154 = scmp.lt.s32.totalorder %s12, 4
      %p155 = pnand %p153, %p154
      %p156 = pneg %p155
      // Predicated region
      $region29: #{tpu_custom_call.1} parent=5 // pred_check
        _
      $region30: #{tpu_custom_call.1} parent=5 // pred_check_branch
        %158 = sbr.rel (%p155) target = $region32
      $region31: #{tpu_custom_call.1} parent=5 // pred_region
        %s159 = ssub.s32 %s12, 1
        %s160 = sand.u32 %s25, 1
        %s161 = scalar_lea.sflag [#allocation3], %s160
        %s162 = sand.u32 %s25, 1
        %s163 = smul.addr %s162, 64
        %s164 = scalar_lea.vmem [#allocation2], %s163
        // Predicated region
        $region33: #{tpu_custom_call.1} parent=31 // pred_check
          %p165 = pneg %p38
        $region34: #{tpu_custom_call.1} parent=31 // pred_check_branch
          %167 = sbr.rel (%p165) target = $region36
        $region35: #{tpu_custom_call.1} parent=31 // pred_region
          %169 = dma.done %s161, 1024
        $region36: #{tpu_custom_call.1} parent=31 // pred_fallthru
          _
        %s170 = sand.u32 %s25, 1
        %s171 = scalar_lea.sflag [#allocation3], %s170
        %s172 = sand.u32 %s25, 1
        %s173 = smul.addr %s172, 64
        %s174 = scalar_lea.vmem [#allocation2], %s173
        %p175 = pneg %p38
        %p176 = pneg %p35
        %p177 = pneg %p59
        %p178 = pneg %p56
        %p179 = pneg %p80
        %p180 = pneg %p77
        %p181 = pneg %p106
        %p182 = pneg %p103
        %s183 = smul.u32 16, %s17
        %p184 = scmp.lt.s32.totalorder %s183, 47
        %s185 = scalar_select %p184, %s183, 47
        %s186 = smul.addr %s185, 4
        %s187 = scalar_lea.vmem %s3, %s186
        %s188 = smul.u32 16, %s17
        %s189 = smul.u32 16, %s17
        %p190 = scmp.lt.s32.totalorder %s189, 47
        %s191 = scalar_select %p190, %s189, 47
        %s192 = smul.addr %s191, 4
        %s193 = scalar_lea.vmem %s3, %s192
        %s194 = smul.u32 16, %s17
        %v195 = vld [vmem:[%s164] sm:$0xf]
        %v196 = vld [vmem:[%s164 + $0x4] sm:$0xf]
        %v197 = vld [vmem:[%s164 + $0x8] sm:$0xf]
        %v198 = vld [vmem:[%s164 + $0xc] sm:$0xf]
        %v199 = vld [vmem:[%s164 + $0x10] sm:$0xf]
        %v200 = vld [vmem:[%s164 + $0x14] sm:$0xf]
        %v201 = vld [vmem:[%s164 + $0x18] sm:$0xf]
        %v202 = vld [vmem:[%s164 + $0x1c] sm:$0xf]
        %v203 = vld [vmem:[%s164 + $0x20] sm:$0xf]
        %v204 = vld [vmem:[%s164 + $0x24] sm:$0xf]
        %v205 = vld [vmem:[%s164 + $0x28] sm:$0xf]
        %v206 = vld [vmem:[%s164 + $0x2c] sm:$0xf]
        %v207 = vld [vmem:[%s164 + $0x30] sm:$0xf]
        %v208 = vld [vmem:[%s164 + $0x34] sm:$0xf]
        %v209 = vld [vmem:[%s164 + $0x38] sm:$0xf]
        %v210 = vld [vmem:[%s164 + $0x3c] sm:$0xf]
        %v211 = vld [vmem:[%s1] sm:$0xf]
        %v212 = vld [vmem:[%s1 + $0x4] sm:$0xf]
        %v213 = vld [vmem:[%s1 + $0x8] sm:$0xf]
        %v214 = vld [vmem:[%s1 + $0xc] sm:$0xf]
        %v215 = vld [vmem:[%s1 + $0x10] sm:$0xf]
        %v216 = vld [vmem:[%s1 + $0x14] sm:$0xf]
        %v217 = vld [vmem:[%s1 + $0x18] sm:$0xf]
        %v218 = vld [vmem:[%s1 + $0x1c] sm:$0xf]
        %v219 = vld [vmem:[%s1 + $0x20] sm:$0xf]
        %v220 = vld [vmem:[%s1 + $0x24] sm:$0xf]
        %v221 = vld [vmem:[%s1 + $0x28] sm:$0xf]
        %v222 = vld [vmem:[%s1 + $0x2c] sm:$0xf]
        %v223 = vld [vmem:[%s1 + $0x30] sm:$0xf]
        %v224 = vld [vmem:[%s1 + $0x34] sm:$0xf]
        %v225 = vld [vmem:[%s1 + $0x38] sm:$0xf]
        %v226 = vld [vmem:[%s1 + $0x3c] sm:$0xf]
        %v227 = vld [vmem:[%s2] sm:$0x1]
        %v229 = vperm.slane %v227, 0
        %v247 = vunpack.c.l.b16 %v195
        %v248 = vunpack.c.l.b16 %v196
        %v249 = vunpack.c.l.b16 %v197
        %v250 = vunpack.c.l.b16 %v198
        %v251 = vunpack.c.l.b16 %v199
        %v252 = vunpack.c.l.b16 %v200
        %v253 = vunpack.c.l.b16 %v201
        %v254 = vunpack.c.l.b16 %v202
        %v255 = vunpack.c.l.b16 %v203
        %v256 = vunpack.c.l.b16 %v204
        %v257 = vunpack.c.l.b16 %v205
        %v258 = vunpack.c.l.b16 %v206
        %v259 = vunpack.c.l.b16 %v207
        %v260 = vunpack.c.l.b16 %v208
        %v261 = vunpack.c.l.b16 %v209
        %v262 = vunpack.c.l.b16 %v210
        %v263 = vpack.c.b16 %v248, %v247
        %v264 = vpack.c.b16 %v250, %v249
        %v265 = vpack.c.b16 %v252, %v251
        %v266 = vpack.c.b16 %v254, %v253
        %v267 = vpack.c.b16 %v256, %v255
        %v268 = vpack.c.b16 %v258, %v257
        %v269 = vpack.c.b16 %v260, %v259
        %v270 = vpack.c.b16 %v262, %v261
        %v295 = vunpack.c.l.b16 %v211
        %v296 = vunpack.c.l.b16 %v212
        %v297 = vunpack.c.l.b16 %v213
        %v298 = vunpack.c.l.b16 %v214
        %v299 = vunpack.c.l.b16 %v215
        %v300 = vunpack.c.l.b16 %v216
        %v301 = vunpack.c.l.b16 %v217
        %v302 = vunpack.c.l.b16 %v218
        %v303 = vunpack.c.l.b16 %v219
        %v304 = vunpack.c.l.b16 %v220
        %v305 = vunpack.c.l.b16 %v221
        %v306 = vunpack.c.l.b16 %v222
        %v307 = vunpack.c.l.b16 %v223
        %v308 = vunpack.c.l.b16 %v224
        %v309 = vunpack.c.l.b16 %v225
        %v310 = vunpack.c.l.b16 %v226
        %v311 = vpack.c.b16 %v296, %v295
        %v312 = vpack.c.b16 %v298, %v297
        %v313 = vpack.c.b16 %v300, %v299
        %v314 = vpack.c.b16 %v302, %v301
        %v315 = vpack.c.b16 %v304, %v303
        %v316 = vpack.c.b16 %v306, %v305
        %v317 = vpack.c.b16 %v308, %v307
        %v318 = vpack.c.b16 %v310, %v309
        %327 = vmatpush.bf16.msra.mxu0 %v318
        %328 = vmatpush.bf16.msra.mxu0 %v317
        %329 = vmatpush.bf16.msra.mxu0 %v316
        %330 = vmatpush.bf16.msra.mxu0 %v315
        %331 = vmatpush.bf16.msra.mxu0 %v314
        %332 = vmatpush.bf16.msra.mxu0 %v313
        %333 = vmatpush.bf16.msra.mxu0 %v312
        %334 = vmatpush.bf16.msra.mxu0 %v311
        %335 = vmatmul.bf16.gmra.mxu0 %v263
        %v336 = vpop.f32.mrf.mxu0
        %v337 = vadd.f32 %v229, %v336
        %v338 = vpop.f32.mrf.mxu0
        %v339 = vadd.f32 %v229, %v338
        %340 = vmatmul.bf16.gmra.mxu0 %v264
        %v341 = vpop.f32.mrf.mxu0
        %v342 = vadd.f32 %v229, %v341
        %v343 = vpop.f32.mrf.mxu0
        %v344 = vadd.f32 %v229, %v343
        %345 = vmatmul.bf16.gmra.mxu0 %v265
        %v346 = vpop.f32.mrf.mxu0
        %v347 = vadd.f32 %v229, %v346
        %v348 = vpop.f32.mrf.mxu0
        %v349 = vadd.f32 %v229, %v348
        %350 = vmatmul.bf16.gmra.mxu0 %v266
        %v351 = vpop.f32.mrf.mxu0
        %v352 = vadd.f32 %v229, %v351
        %v353 = vpop.f32.mrf.mxu0
        %v354 = vadd.f32 %v229, %v353
        %355 = vmatmul.bf16.gmra.mxu0 %v267
        %v356 = vpop.f32.mrf.mxu0
        %v357 = vadd.f32 %v229, %v356
        %v358 = vpop.f32.mrf.mxu0
        %v359 = vadd.f32 %v229, %v358
        %360 = vmatmul.bf16.gmra.mxu0 %v268
        %v361 = vpop.f32.mrf.mxu0
        %v362 = vadd.f32 %v229, %v361
        %v363 = vpop.f32.mrf.mxu0
        %v364 = vadd.f32 %v229, %v363
        %365 = vmatmul.bf16.gmra.mxu0 %v269
        %v366 = vpop.f32.mrf.mxu0
        %v367 = vadd.f32 %v229, %v366
        %v368 = vpop.f32.mrf.mxu0
        %v369 = vadd.f32 %v229, %v368
        %370 = vmatmul.bf16.gmra.mxu0 %v270
        %v371 = vpop.f32.mrf.mxu0
        %v372 = vadd.f32 %v229, %v371
        %v373 = vpop.f32.mrf.mxu0
        %v374 = vadd.f32 %v229, %v373
        %375 = vdwg.mxu0
        %v376 = vmax.f32 %v337, 0.0
        %v377 = vmax.f32 %v339, 0.0
        %v378 = vmax.f32 %v342, 0.0
        %v379 = vmax.f32 %v344, 0.0
        %v380 = vmax.f32 %v347, 0.0
        %v381 = vmax.f32 %v349, 0.0
        %v382 = vmax.f32 %v352, 0.0
        %v383 = vmax.f32 %v354, 0.0
        %v384 = vmax.f32 %v357, 0.0
        %v385 = vmax.f32 %v359, 0.0
        %v386 = vmax.f32 %v362, 0.0
        %v387 = vmax.f32 %v364, 0.0
        %v388 = vmax.f32 %v367, 0.0
        %v389 = vmax.f32 %v369, 0.0
        %v390 = vmax.f32 %v372, 0.0
        %v391 = vmax.f32 %v374, 0.0
        %v392 = vpack.c.bf16 %v376, %v376
        %v393 = vpack.c.bf16 %v377, %v377
        %v394 = vpack.c.bf16 %v378, %v378
        %v395 = vpack.c.bf16 %v379, %v379
        %v396 = vpack.c.bf16 %v380, %v380
        %v397 = vpack.c.bf16 %v381, %v381
        %v398 = vpack.c.bf16 %v382, %v382
        %v399 = vpack.c.bf16 %v383, %v383
        %v400 = vpack.c.bf16 %v384, %v384
        %v401 = vpack.c.bf16 %v385, %v385
        %v402 = vpack.c.bf16 %v386, %v386
        %v403 = vpack.c.bf16 %v387, %v387
        %v404 = vpack.c.bf16 %v388, %v388
        %v405 = vpack.c.bf16 %v389, %v389
        %v406 = vpack.c.bf16 %v390, %v390
        %v407 = vpack.c.bf16 %v391, %v391
        %vm408 = vcmask 519168
        %409 = vst.msk [vmem:[%s193] sm:$0xf] %vm408, %v392
        %410 = vst.msk [vmem:[%s193 + $0x4] sm:$0xf] %vm408, %v393
        %411 = vst.msk [vmem:[%s193 + $0x8] sm:$0xf] %vm408, %v394
        %412 = vst.msk [vmem:[%s193 + $0xc] sm:$0xf] %vm408, %v395
        %413 = vst.msk [vmem:[%s193 + $0x10] sm:$0xf] %vm408, %v396
        %414 = vst.msk [vmem:[%s193 + $0x14] sm:$0xf] %vm408, %v397
        %415 = vst.msk [vmem:[%s193 + $0x18] sm:$0xf] %vm408, %v398
        %416 = vst.msk [vmem:[%s193 + $0x1c] sm:$0xf] %vm408, %v399
        %417 = vst.msk [vmem:[%s193 + $0x20] sm:$0xf] %vm408, %v400
        %418 = vst.msk [vmem:[%s193 + $0x24] sm:$0xf] %vm408, %v401
        %419 = vst.msk [vmem:[%s193 + $0x28] sm:$0xf] %vm408, %v402
        %420 = vst.msk [vmem:[%s193 + $0x2c] sm:$0xf] %vm408, %v403
        %421 = vst.msk [vmem:[%s193 + $0x30] sm:$0xf] %vm408, %v404
        %422 = vst.msk [vmem:[%s193 + $0x34] sm:$0xf] %vm408, %v405
        %423 = vst.msk [vmem:[%s193 + $0x38] sm:$0xf] %vm408, %v406
        %424 = vst.msk [vmem:[%s193 + $0x3c] sm:$0xf] %vm408, %v407
        %s425 = smul.u32 16, %s17
        %p426 = scmp.lt.s32.totalorder %s425, 47
        %s427 = scalar_select %p426, %s425, 47
        %s428 = smul.addr %s427, 4
        %s429 = scalar_lea.vmem %s3, %s428
        // Predicated region
        $region37: #{tpu_custom_call.1} parent=31 // pred_check
          %p430 = pneg %p103
        $region38: #{tpu_custom_call.1} parent=31 // pred_check_branch
          %432 = sbr.rel (%p430) target = $region40
        $region39: #{tpu_custom_call.1} parent=31 // pred_region
          %s433 = smul.u32 16, %s17
        $region40: #{tpu_custom_call.1} parent=31 // pred_fallthru
          _
      $region32: #{tpu_custom_call.1} parent=5 // pred_fallthru
        _
      %p434 = scmp.le.s32.totalorder 2, %s12
      // Predicated region
      $region41: #{tpu_custom_call.1} parent=5 // pred_check
        %p435 = pneg %p434
      $region42: #{tpu_custom_call.1} parent=5 // pred_check_branch
        %437 = sbr.rel (%p435) target = $region44
      $region43: #{tpu_custom_call.1} parent=5 // pred_region
        %s438 = ssub.s32 %s12, 2
        // Predicated region
        $region45: #{tpu_custom_call.1} parent=43 // pred_check
          %p439 = pneg %p109
        $region46: #{tpu_custom_call.1} parent=43 // pred_check_branch
          %441 = sbr.rel (%p439) target = $region48
        $region47: #{tpu_custom_call.1} parent=43 // pred_region
          %s442 = smul.u32 16, %s18
          %p443 = scmp.lt.s32.totalorder %s442, 47
          %s444 = scalar_select %p443, %s442, 47
          %s445 = smul.addr %s444, 4
          %s446 = scalar_lea.vmem %s3, %s445
        $region48: #{tpu_custom_call.1} parent=43 // pred_fallthru
          _
      $region44: #{tpu_custom_call.1} parent=5 // pred_fallthru
        _
    $region6: #{tpu_custom_call.1} parent=1 // loop_footer
      %s16 = sadd.s32 1, %s12
    $region7: #{tpu_custom_call.1} parent=1 // loop_footer_branch
      %11 = sbr.rel target = $region3
    $region8: #{tpu_custom_call.1} parent=1 // loop_exit
      _
    %447 = vsyncpa [#allocation3], 1
    %s448 = scalar_lea.sflag [#allocation3], 1
    %449 = vsyncpa %s448, 1

</llo_original>
